<compile_context>
chip_gen: v7x
topology: tpu7x:2x2x1
jax: 0.10.0
libtpu: 0.0.40
codegen_flags: <defaults>
</compile_context>

<pallas_src>
import jax
import jax.numpy as jnp
from jax.experimental import pallas as pl
from jax.experimental.pallas import tpu as pltpu


def edl_head_kernel(x_ref, w_ref, b_ref, out_ref):
    # x_ref:   (tile_r, fold*F)   -- one batch tile (fold rows folded per row)
    # w_ref:   (fold*F, fold*C)   -- block-diagonal weight, resident in VMEM
    # b_ref:   (1, fold*C)        -- tiled bias, resident in VMEM
    # out_ref: (tile_r, fold*C)   -- lane-dense output tile
    raw = jnp.dot(x_ref[...], w_ref[...],
                  preferred_element_type=jnp.float32) + b_ref[...]
    # Numerically-stable softplus: max(x, 0) + log1p(exp(-|x|))  (VPU + EUP)
    sp = jnp.maximum(raw, 0.0) + jnp.log1p(jnp.exp(-jnp.abs(raw)))
    # Keep output f32: bf16 rounding could collapse alphas barely above 1.0
    # back to exactly 1.0, breaking the Dirichlet alpha > 1 invariant.
    out_ref[...] = (sp + 1.0).astype(out_ref.dtype)


def _round_up(a, b):
    return ((a + b - 1) // b) * b


def edl_head(x, weight, bias, *, block_rows=512):
    """EDL head forward: softplus(x @ W + b) + 1.

    x:      (B, F) float32
    weight: (F, C) float32   (stored transposed vs. torch's (C, F))
    bias:   (C,)   float32
    returns alpha (B, C) float32
    """
    B, F = x.shape
    Fw, C = weight.shape
    assert Fw == F and bias.shape == (C,)

    # Fold rows into lanes so the kernel's output last dim is a multiple of
    # 128 (unmasked vst). fold=8 for C=16, fold=1 if C is already lane-dense.
    fold = (128 // C) if (C < 128 and 128 % C == 0) else 1

    # Pad the batch so it folds evenly and tiles evenly.
    rows = pl.cdiv(B, fold)                       # folded rows
    tile_r = min(block_rows, _round_up(rows, 8))  # multiple of 8 sublanes
    rows_pad = _round_up(rows, tile_r)
    b_pad = rows_pad * fold

    x_p = x if b_pad == B else jnp.pad(x, ((0, b_pad - B), (0, 0)))
    # Row-major contiguous reshape: x_f[r, j*F + f] == x[r*fold + j, f]
    x_f = x_p.reshape(rows_pad, fold * F)

    if fold == 1:
        w_f = weight
        b_f = bias.reshape(1, C)
    else:
        # Block-diagonal weight: out_f[r, j*C + c] = sum_f x[r*fold+j, f] W[f, c]
        w_f = jnp.kron(jnp.eye(fold, dtype=weight.dtype), weight)
        b_f = jnp.tile(bias, fold).reshape(1, fold * C)

    ff = fold * F
    fc = fold * C
    grid = (rows_pad // tile_r,)

    # VMEM budget: double-buffered x/out tiles + resident weight/bias + slack.
    vmem_bytes = (2 * tile_r * (ff + fc) + ff * fc + fc) * 4 + (4 << 20)
    vmem_bytes = int(max(vmem_bytes, 16 << 20))

    out_f = pl.pallas_call(
        edl_head_kernel,
        out_shape=jax.ShapeDtypeStruct((rows_pad, fc), jnp.float32),
        grid=grid,
        in_specs=[
            pl.BlockSpec((tile_r, ff), lambda i: (i, 0)),   # streamed x tile
            pl.BlockSpec((ff, fc), lambda i: (0, 0)),       # resident weight
            pl.BlockSpec((1, fc), lambda i: (0, 0)),        # resident bias
        ],
        out_specs=pl.BlockSpec((tile_r, fc), lambda i: (i, 0)),
        compiler_params=pltpu.CompilerParams(
            dimension_semantics=("parallel",),   # shard batch across TCs (v7x)
            vmem_limit_bytes=vmem_bytes,
        ),
    )(x_f, w_f, b_f)

    # Free contiguous reshape back to (B, C), drop padded rows.
    return out_f.reshape(b_pad, C)[:B]


if __name__ == "__main__":
    # Deterministic synthetic params & inputs (no checkpoint loading).
    key = jax.random.PRNGKey(0)
    kx, kw, kb, kx2 = jax.random.split(key, 4)

    batch = 8
    in_features = 32
    num_classes = 16

    x = jax.random.normal(kx, (batch, in_features), dtype=jnp.float32)
    # Mimic torch.nn.Linear default init scale ~ U(-1/sqrt(F), 1/sqrt(F))
    limit = 1.0 / jnp.sqrt(jnp.float32(in_features))
    weight = jax.random.uniform(
        kw, (in_features, num_classes), minval=-limit, maxval=limit,
        dtype=jnp.float32)
    bias = jax.random.uniform(
        kb, (num_classes,), minval=-limit, maxval=limit, dtype=jnp.float32)

    alpha = edl_head(x, weight, bias)
    jax.block_until_ready(alpha)

    # Reference check in plain JAX (same semantics as torch: softplus(xW+b)+1).
    alpha_ref = jax.nn.softplus(x @ weight + bias) + 1.0
    assert alpha.shape == (batch, num_classes)
    assert jnp.allclose(alpha, alpha_ref, atol=1e-5, rtol=1e-5)
    assert bool(jnp.all(alpha > 1.0))  # Dirichlet alphas must exceed 1.

    # Secondary check: batch not a multiple of the fold/tile (exercises padding
    # + multi-row tiling path).
    batch2 = 200
    x2 = jax.random.normal(kx2, (batch2, in_features), dtype=jnp.float32)
    alpha2 = edl_head(x2, weight, bias)
    jax.block_until_ready(alpha2)
    alpha2_ref = jax.nn.softplus(x2 @ weight + bias) + 1.0
    assert alpha2.shape == (batch2, num_classes)
    assert jnp.allclose(alpha2, alpha2_ref, atol=1e-5, rtol=1e-5)
    assert bool(jnp.all(alpha2 > 1.0))

    print("KERNEL_OK")
</pallas_src>

<mosaic_0001>
module attributes {stable_mosaic.version = 11 : i64} {
  func.func @edl_head_kernel(%arg0: i32, %arg1: memref<8x256xf32, #tpu.memory_space<vmem>>, %arg2: memref<256x128xf32, #tpu.memory_space<vmem>>, %arg3: memref<1x128xf32, #tpu.memory_space<vmem>>, %arg4: memref<8x128xf32, #tpu.memory_space<vmem>>) attributes {dimension_semantics = [#tpu.dimension_semantics<parallel>], iteration_bounds = array<i64: 1>, scalar_prefetch = 0 : i64, scratch_operands = 0 : i64, tpu.core_type = #tpu.core_type<tc>, window_params = [{transform_indices = @transform_0, window_bounds = array<i64: 8, 256>}, {pipeline_mode = #tpu.pipeline_mode<synchronous>, transform_indices = @transform_1, window_bounds = array<i64: 256, 128>}, {pipeline_mode = #tpu.pipeline_mode<synchronous>, transform_indices = @transform_2, window_bounds = array<i64: 1, 128>}, {transform_indices = @transform_3, window_bounds = array<i64: 8, 128>}]} {
    %c0 = arith.constant 0 : index
    %c0_0 = arith.constant 0 : index
    %0 = vector.load %arg1[%c0, %c0_0] : memref<8x256xf32, #tpu.memory_space<vmem>>, vector<8x256xf32>
    %c0_1 = arith.constant 0 : index
    %c0_2 = arith.constant 0 : index
    %1 = vector.load %arg2[%c0_1, %c0_2] : memref<256x128xf32, #tpu.memory_space<vmem>>, vector<256x128xf32>
    %cst = arith.constant dense<0.000000e+00> : vector<8x128xf32>
    %2 = tpu.matmul %0, %1, %cst {dimension_numbers = #tpu.dot_dimension_numbers<[1], [0], [0], [1], [0, 0, 1, 1], [], []>} : vector<8x256xf32>, vector<256x128xf32>, vector<8x128xf32> -> vector<8x128xf32>
    %c0_3 = arith.constant 0 : index
    %c0_4 = arith.constant 0 : index
    %3 = vector.load %arg3[%c0_3, %c0_4] : memref<1x128xf32, #tpu.memory_space<vmem>>, vector<1x128xf32>
    %4 = vector.broadcast %3 : vector<1x128xf32> to vector<8x128xf32>
    %5 = arith.addf %2, %4 : vector<8x128xf32>
    %cst_5 = arith.constant 0.000000e+00 : f32
    %6 = vector.broadcast %cst_5 : f32 to vector<8x128xf32>
    %7 = arith.maximumf %5, %6 : vector<8x128xf32>
    %8 = math.absf %5 : vector<8x128xf32>
    %cst_6 = arith.constant 0.000000e+00 : f32
    %9 = vector.broadcast %cst_6 : f32 to vector<8x128xf32>
    %10 = arith.subf %9, %8 : vector<8x128xf32>
    %11 = math.exp %10 : vector<8x128xf32>
    %12 = math.log1p %11 : vector<8x128xf32>
    %13 = arith.addf %7, %12 : vector<8x128xf32>
    %cst_7 = arith.constant 1.000000e+00 : f32
    %14 = vector.broadcast %cst_7 : f32 to vector<8x128xf32>
    %15 = arith.addf %13, %14 : vector<8x128xf32>
    %c0_8 = arith.constant 0 : index
    %c0_9 = arith.constant 0 : index
    %16 = vector.load %arg4[%c0_8, %c0_9] : memref<8x128xf32, #tpu.memory_space<vmem>>, vector<8x128xf32>
    tpu.vector_store %arg4[%c0_8, %c0_9], %15 {strides = array<i32>} : memref<8x128xf32, #tpu.memory_space<vmem>>, vector<8x128xf32>,
    return
  }
  func.func @transform_0(%arg0: i32) -> (i32, i32) {
    %c0_i32 = arith.constant 0 : i32
    %c0_i32_0 = arith.constant 0 : i32
    return %arg0, %c0_i32 : i32, i32
  }
  func.func @transform_1(%arg0: i32) -> (i32, i32) {
    %c0_i32 = arith.constant 0 : i32
    %c0_i32_0 = arith.constant 0 : i32
    %c0_i32_1 = arith.constant 0 : i32
    return %c0_i32, %c0_i32_0 : i32, i32
  }
  func.func @transform_2(%arg0: i32) -> (i32, i32) {
    %c0_i32 = arith.constant 0 : i32
    %c0_i32_0 = arith.constant 0 : i32
    %c0_i32_1 = arith.constant 0 : i32
    return %c0_i32, %c0_i32_0 : i32, i32
  }
  func.func @transform_3(%arg0: i32) -> (i32, i32) {
    %c0_i32 = arith.constant 0 : i32
    %c0_i32_0 = arith.constant 0 : i32
    return %arg0, %c0_i32 : i32, i32
  }
}

</mosaic_0001>

<llo_original>
// kernel: tpu_custom_call.1
$region0: #{tpu_custom_call.1}
  #allocation0 [shape = 'u32[]', space=smem, size = 0x4, offset = 0x4, fixed_abs, tag = 'smem constant byte address 0x4 - core index']
  #allocation1 [shape = 'u32[144,128]{1,0:T(1,128)}', space=vmem, size = 0x12000, scoped, tag = 'internal scratch']
  %s0 = inlined_call_operand.hbm [shape: f32[8,256], index: 0, kind: input, shape index: {}]
  %s1 = inlined_call_operand.hbm [shape: f32[256,128], index: 1, kind: input, shape index: {}]
  %s2 = inlined_call_operand.vmem [shape: f32[1,128], index: 2, kind: input, shape index: {}]
  %s3 = inlined_call_operand.hbm [shape: f32[8,128], index: 3, kind: output, shape index: {}]
  %s4 = sld [smem:[#allocation0]]
  $region30: #{tpu_custom_call.1} parent=0
    _
  %s6 = ssub.s32 1, %s4
  %s7 = scalar_select 0, %s6, %s4
  $region1: #{tpu_custom_call.1} parent=0
    #allocation2 [shape = 'u8[8192]{0}', space=vmem, size = 0x2000, scoped, tag = 'input window, operand 0, single buffered']
    #allocation3 [shape = 's32[1]{0}', space=sflag, size = 0x4, scoped, tag = 'scoped memory for tpu_custom_call.1']
    #allocation4 [shape = 's32[1]{0}', space=sflag, size = 0x4, scoped, tag = 'scoped memory for tpu_custom_call.1']
    #allocation5 [shape = 'u8[131072]{0}', space=vmem, size = 0x20000, scoped, tag = 'input window, operand 1, single buffered']
    #allocation6 [shape = 's32[1]{0}', space=sflag, size = 0x4, scoped, tag = 'scoped memory for tpu_custom_call.1']
    #allocation7 [shape = 'u8[4096]{0}', space=vmem, size = 0x1000, scoped, tag = 'output window, operand 0, single buffered']
    %8 = vsyncpa [#allocation3], 0
    %9 = vsyncpa [#allocation6], 0
    %10 = vsyncpa [#allocation4], 0
    // Predicated region
    $region2: #{tpu_custom_call.1} parent=1 // pred_check
      _
    $region3: #{tpu_custom_call.1} parent=1 // pred_check_branch
      %12 = sbr.rel (0) target = $region5
    $region4: #{tpu_custom_call.1} parent=1 // pred_region
      %s14 = ssub.s32 256, 256
      %15 = vsyncadd [#allocation3], %s14
      %s17 = sshll.u32 [#allocation2], 4
      %s18 = int_to_ptr.vmem [resolvable:$true] %s17
      %20 = dma.hbm_to_vmem [thread:$0]  %s0, 256, %s18, [#allocation3]
    $region5: #{tpu_custom_call.1} parent=1 // pred_fallthru
      _
    // Predicated region
    $region6: #{tpu_custom_call.1} parent=1 // pred_check
      _
    $region7: #{tpu_custom_call.1} parent=1 // pred_check_branch
      %22 = sbr.rel (0) target = $region9
    $region8: #{tpu_custom_call.1} parent=1 // pred_region
      %s24 = ssub.s32 4096, 4096
      %25 = vsyncadd [#allocation6], %s24
      %s26 = sshll.u32 [#allocation5], 4
      %s27 = int_to_ptr.vmem [resolvable:$true] %s26
      %32 = dma.hbm_to_vmem [thread:$0]  %s1, 4096, %s27, [#allocation6], 128, 128, 8
    $region9: #{tpu_custom_call.1} parent=1 // pred_fallthru
      _
    // Predicated region
    $region10: #{tpu_custom_call.1} parent=1 // pred_check
      _
    $region11: #{tpu_custom_call.1} parent=1 // pred_check_branch
      %34 = sbr.rel (0) target = $region13
    $region12: #{tpu_custom_call.1} parent=1 // pred_region
      _
    $region13: #{tpu_custom_call.1} parent=1 // pred_fallthru
      _
    // Predicated region
    $region14: #{tpu_custom_call.1} parent=1 // pred_check
      _
    $region15: #{tpu_custom_call.1} parent=1 // pred_check_branch
      %36 = sbr.rel (0) target = $region17
    $region16: #{tpu_custom_call.1} parent=1 // pred_region
      %37 = dma.done [#allocation3], 256
    $region17: #{tpu_custom_call.1} parent=1 // pred_fallthru
      _
    // Predicated region
    $region18: #{tpu_custom_call.1} parent=1 // pred_check
      _
    $region19: #{tpu_custom_call.1} parent=1 // pred_check_branch
      %39 = sbr.rel (0) target = $region21
    $region20: #{tpu_custom_call.1} parent=1 // pred_region
      %40 = dma.done [#allocation6], 4096
    $region21: #{tpu_custom_call.1} parent=1 // pred_fallthru
      _
    %v41 = vld [vmem:[#allocation2] sm:$0xff]
    %v42 = vld [vmem:[#allocation2 + $0x8] sm:$0xff]
    %v43 = vld [vmem:[#allocation5] sm:$0xff]
    %v44 = vld [vmem:[#allocation5 + $0x8] sm:$0xff]
    %v45 = vld [vmem:[#allocation5 + $0x10] sm:$0xff]
    %v46 = vld [vmem:[#allocation5 + $0x18] sm:$0xff]
    %v47 = vld [vmem:[#allocation5 + $0x20] sm:$0xff]
    %v48 = vld [vmem:[#allocation5 + $0x28] sm:$0xff]
    %v49 = vld [vmem:[#allocation5 + $0x30] sm:$0xff]
    %v50 = vld [vmem:[#allocation5 + $0x38] sm:$0xff]
    %v51 = vld [vmem:[#allocation5 + $0x40] sm:$0xff]
    %v52 = vld [vmem:[#allocation5 + $0x48] sm:$0xff]
    %v53 = vld [vmem:[#allocation5 + $0x50] sm:$0xff]
    %v54 = vld [vmem:[#allocation5 + $0x58] sm:$0xff]
    %v55 = vld [vmem:[#allocation5 + $0x60] sm:$0xff]
    %v56 = vld [vmem:[#allocation5 + $0x68] sm:$0xff]
    %v57 = vld [vmem:[#allocation5 + $0x70] sm:$0xff]
    %v58 = vld [vmem:[#allocation5 + $0x78] sm:$0xff]
    %v59 = vld [vmem:[#allocation5 + $0x80] sm:$0xff]
    %v60 = vld [vmem:[#allocation5 + $0x88] sm:$0xff]
    %v61 = vld [vmem:[#allocation5 + $0x90] sm:$0xff]
    %v62 = vld [vmem:[#allocation5 + $0x98] sm:$0xff]
    %v63 = vld [vmem:[#allocation5 + $0xa0] sm:$0xff]
    %v64 = vld [vmem:[#allocation5 + $0xa8] sm:$0xff]
    %v65 = vld [vmem:[#allocation5 + $0xb0] sm:$0xff]
    %v66 = vld [vmem:[#allocation5 + $0xb8] sm:$0xff]
    %v67 = vld [vmem:[#allocation5 + $0xc0] sm:$0xff]
    %v68 = vld [vmem:[#allocation5 + $0xc8] sm:$0xff]
    %v69 = vld [vmem:[#allocation5 + $0xd0] sm:$0xff]
    %v70 = vld [vmem:[#allocation5 + $0xd8] sm:$0xff]
    %v71 = vld [vmem:[#allocation5 + $0xe0] sm:$0xff]
    %v72 = vld [vmem:[#allocation5 + $0xe8] sm:$0xff]
    %v73 = vld [vmem:[#allocation5 + $0xf0] sm:$0xff]
    %v74 = vld [vmem:[#allocation5 + $0xf8] sm:$0xff]
    %v75 = vld [vmem:[%s2] sm:$0x1]
    %v77 = vlaneseq
    %v78 = vshrl.u32 %v77, 7
    %v79 = vsub.s32 0, %v78
    %v80 = vrot.slane %v75, %v79
    %82 = vmatprep.subr.mxu0 0.0
    %83 = vmatpush1.msra.mxu0 %v43
    %84 = vmatprep.subr.mxu0 0.0
    %85 = vmatpush1.msra.mxu0 %v44
    %86 = vmatprep.subr.mxu0 0.0
    %87 = vmatpush1.msra.mxu0 %v45
    %88 = vmatprep.subr.mxu0 0.0
    %89 = vmatpush1.msra.mxu0 %v46
    %90 = vmatprep.subr.mxu0 0.0
    %91 = vmatpush1.msra.mxu0 %v47
    %92 = vmatprep.subr.mxu0 0.0
    %93 = vmatpush1.msra.mxu0 %v48
    %94 = vmatprep.subr.mxu0 0.0
    %95 = vmatpush1.msra.mxu0 %v49
    %96 = vmatprep.subr.mxu0 0.0
    %97 = vmatpush1.msra.mxu0 %v50
    %98 = vmatprep.subr.mxu0 0.0
    %99 = vmatpush1.msra.mxu0 %v51
    %100 = vmatprep.subr.mxu0 0.0
    %101 = vmatpush1.msra.mxu0 %v52
    %102 = vmatprep.subr.mxu0 0.0
    %103 = vmatpush1.msra.mxu0 %v53
    %104 = vmatprep.subr.mxu0 0.0
    %105 = vmatpush1.msra.mxu0 %v54
    %106 = vmatprep.subr.mxu0 0.0
    %107 = vmatpush1.msra.mxu0 %v55
    %108 = vmatprep.subr.mxu0 0.0
    %109 = vmatpush1.msra.mxu0 %v56
    %110 = vmatprep.subr.mxu0 0.0
    %111 = vmatpush1.msra.mxu0 %v57
    %112 = vmatprep.subr.mxu0 0.0
    %113 = vmatpush1.msra.mxu0 %v58
    %114 = vmatprep.subr.mxu0 0.0
    %115 = vmatpush1.msra.mxu0 %v59
    %116 = vmatprep.subr.mxu0 0.0
    %117 = vmatpush1.msra.mxu0 %v60
    %118 = vmatprep.subr.mxu0 0.0
    %119 = vmatpush1.msra.mxu0 %v61
    %120 = vmatprep.subr.mxu0 0.0
    %121 = vmatpush1.msra.mxu0 %v62
    %122 = vmatprep.subr.mxu0 0.0
    %123 = vmatpush1.msra.mxu0 %v63
    %124 = vmatprep.subr.mxu0 0.0
    %125 = vmatpush1.msra.mxu0 %v64
    %126 = vmatprep.subr.mxu0 0.0
    %127 = vmatpush1.msra.mxu0 %v65
    %128 = vmatprep.subr.mxu0 0.0
    %129 = vmatpush1.msra.mxu0 %v66
    %130 = vmatprep.subr.mxu0 0.0
    %131 = vmatpush1.msra.mxu0 %v67
    %132 = vmatprep.subr.mxu0 0.0
    %133 = vmatpush1.msra.mxu0 %v68
    %134 = vmatprep.subr.mxu0 0.0
    %135 = vmatpush1.msra.mxu0 %v69
    %136 = vmatprep.subr.mxu0 0.0
    %137 = vmatpush1.msra.mxu0 %v70
    %138 = vmatprep.subr.mxu0 0.0
    %139 = vmatpush1.msra.mxu0 %v71
    %140 = vmatprep.subr.mxu0 0.0
    %141 = vmatpush1.msra.mxu0 %v72
    %142 = vmatprep.subr.mxu0 0.0
    %143 = vmatpush1.msra.mxu0 %v73
    %144 = vmatprep.subr.mxu0 0.0
    %145 = vmatpush1.msra.mxu0 %v74
    %146 = vmatprep.mubr.f32.mxu0 %v42
    %147 = vmatmul.mubr.f32.gmra.mrb[0].mxu0 %v41
    %v148 = vpop.f32.mrb[0].mxu0
    %v149 = vadd.f32 %v80, %v148
    %v150 = vpop.f32.mrb[0].mxu0
    %151 = vdwg.mxu0
    %v152 = vmax.f32 %v149, 0.0
    %v153 = vand.u32 2147483647, %v149
    %v154 = vsub.f32 0.0, %v153
    %v155 = vmul.f32 %v154, 1.442695
    %v156 = vpow.pop %v155
    %v157 = vadd.f32 %v156, 1.0
    %v158 = vlog2.pop %v157
    %v159 = vmul.f32 %v158, 0.6931472
    %v160 = vmul.f32 -0.5, %v156
    %v161 = vadd.f32 %v160, 1.0
    %v162 = vmul.f32 %v161, %v156
    %v163 = vand.u32 2147483647, %v156
    %vm164 = vcmp.lt.f32.partialorder %v163, 0.0004427343
    %v165 = vsel %vm164, %v162, %v159
    %v166 = vadd.f32 %v152, %v165
    %v167 = vadd.f32 %v166, 1.0
    %168 = vst [vmem:[#allocation7] sm:$0xff] %v167
    // Predicated region
    $region22: #{tpu_custom_call.1} parent=1 // pred_check
      _
    $region23: #{tpu_custom_call.1} parent=1 // pred_check_branch
      %170 = sbr.rel (0) target = $region25
    $region24: #{tpu_custom_call.1} parent=1 // pred_region
      %s172 = ssub.s32 128, 128
      %173 = vsyncadd [#allocation4], %s172
      %s175 = sshll.u32 [#allocation7], 4
      %s176 = int_to_ptr.vmem [resolvable:$true] %s175
      %178 = dma.vmem_to_hbm [thread:$0]  %s176, 128, %s3, [#allocation4]
    $region25: #{tpu_custom_call.1} parent=1 // pred_fallthru
      _
    // Predicated region
    $region26: #{tpu_custom_call.1} parent=1 // pred_check
      _
    $region27: #{tpu_custom_call.1} parent=1 // pred_check_branch
      %180 = sbr.rel (0) target = $region29
    $region28: #{tpu_custom_call.1} parent=1 // pred_region
      %181 = dma.done [#allocation4], 128
    $region29: #{tpu_custom_call.1} parent=1 // pred_fallthru
      _
    %182 = vsyncpa [#allocation3], 1
    %183 = vsyncpa [#allocation6], 1
    %184 = vsyncpa [#allocation4], 1

</llo_original>
